<compile_context>
chip_gen: v6e
topology: v6e:2x2x1
jax: 0.10.0
libtpu: 0.0.40
codegen_flags: <defaults>
</compile_context>

<pallas_src>
import functools

import jax
import jax.numpy as jnp
from jax.experimental import pallas as pl
from jax.experimental.pallas import tpu as pltpu

LANES = 128
SUBLANES = 8
VMEM_LIMIT_BYTES = 32 * 1024 * 1024      # scoped VMEM ceiling (safe on v5e/v6e/v7x)
PER_BUFFER_BYTES = 4 * 1024 * 1024       # per input, per pipeline buffer (review sweet spot)


def _round_up(x, m):
    return ((x + m - 1) // m) * m


def _default_nsplit():
    """Number of TensorCores that share one JAX device (megacore chips -> 2)."""
    try:
        kind = jax.devices()[0].device_kind.lower()
    except Exception:
        return 1
    return 2 if any(s in kind for s in ("v7", "v5p", "v4")) else 1


def _make_kernel(*, inner, block_rows, total_rows, needs_mask, binary_targets):
    """Kernel over 2-D (block_rows, lanes) tiles; accumulates per-lane partial sums."""

    def kernel(x_ref, t_ref, loss_acc_ref, tgt_acc_ref):
        c = pl.program_id(0)           # parallel (per-TensorCore) axis
        i = pl.program_id(1)           # arbitrary (streaming) axis

        @pl.when(i == 0)
        def _init():
            loss_acc_ref[...] = jnp.zeros_like(loss_acc_ref)
            tgt_acc_ref[...] = jnp.zeros_like(tgt_acc_ref)

        x = x_ref[...].astype(jnp.float32)    # (block_rows, lanes)
        t = t_ref[...].astype(jnp.float32)

        # PyTorch binary_cross_entropy clamps each log term at -100.  We accumulate the
        # UN-negated value (negation happens once in the epilogue) to save VALU ops.
        if binary_targets:
            # Single EUP log per element; exact for targets in {0, 1}.
            nl = jnp.maximum(jnp.log(jnp.where(t > 0.5, x, 1.0 - x)), -100.0)
        else:
            log_x = jnp.maximum(jnp.log(x), -100.0)
            log_1mx = jnp.maximum(jnp.log(1.0 - x), -100.0)
            nl = log_1mx + t * (log_x - log_1mx)

        if needs_mask:
            # Partial last block: out-of-range rows hold garbage (possibly NaN after log);
            # discard them with a SELECT (never multiply-by-zero).
            start = (c * inner + i) * block_rows
            rows = jax.lax.broadcasted_iota(jnp.int32, x.shape, 0) + start
            valid = rows < total_rows
            nl = jnp.where(valid, nl, 0.0)
            t = jnp.where(valid, t, 0.0)

        # Per-lane column sums (rows reduce to 1); accumulate into row 0 of the resident
        # (8, lanes) output block.  Rows 1..7 stay zero from the init.
        loss_acc_ref[0:1, :] = loss_acc_ref[0:1, :] + jnp.sum(nl, axis=0, keepdims=True)
        tgt_acc_ref[0:1, :] = tgt_acc_ref[0:1, :] + jnp.sum(t, axis=0, keepdims=True)

    return kernel


def uloss_reference(inp, tgt):
    """Pure-JAX reference (and small-problem fallback), matches the PyTorch module."""
    x = inp.astype(jnp.float32)
    t = tgt.astype(jnp.float32)
    loss = -(t * jnp.maximum(jnp.log(x), -100.0)
             + (1.0 - t) * jnp.maximum(jnp.log(1.0 - x), -100.0))
    a = jnp.mean(loss, axis=0)
    b = jnp.sum(t, axis=0)
    b = jnp.where(b == 0.0, 1.0, b)
    return jnp.sum(a / b)


def uloss_forward(inp, tgt, weights=None, *,
                  assume_binary_targets=False,
                  min_kernel_elems=16384,
                  per_buffer_bytes=PER_BUFFER_BYTES,
                  nsplit=None):
    """Pallas implementation of ULoss.forward.

    `weights` (the nn.Parameter of shape (nb_tasks,)) is unused by the reference forward
    pass; it is accepted only for interface fidelity.  Inputs may be float32 or bfloat16;
    accumulation is always float32.
    """
    assert inp.shape == tgt.shape and inp.ndim == 2
    B, T = inp.shape
    N = B * T

    # ---- choose a copy-free view ------------------------------------------------------
    # Lane-dense "flat" view: tasks fold into the 128-lane axis (task = lane % T) whenever
    # T | 128 and B*T is a multiple of 128 -> free contiguous reshape, no padding.
    flat_ok = T > 0 and (128 % T == 0) and (N % LANES == 0) and (N // LANES >= SUBLANES)
    if flat_ok:
        lanes, R = LANES, N // LANES
        xv = inp.reshape(R, LANES)
        tv = tgt.reshape(R, LANES)
    else:
        # Generic view: stream (B, T) directly; block last dim = full T (no task padding).
        lanes, R = T, B
        xv, tv = inp, tgt

    # Small / untileable problems: launch + epilogue overhead dominates -> pure JAX.
    if R < SUBLANES or N < min_kernel_elems:
        return uloss_reference(inp, tgt)

    # ---- grid / tile selection ---------------------------------------------------------
    if nsplit is None:
        nsplit = _default_nsplit()
    nsplit = max(1, min(nsplit, R // SUBLANES))

    itemsize = jnp.dtype(inp.dtype).itemsize
    lane_pad = _round_up(lanes, LANES)                 # physical lanes per row in VMEM
    row_bytes = lane_pad * itemsize
    budget_rows = max(SUBLANES, (per_buffer_bytes // row_bytes) // SUBLANES * SUBLANES)

    per_core_rows = -(-R // nsplit)
    bR = min(budget_rows, _round_up(per_core_rows, SUBLANES))
    if bR > R:                                         # keep the block inside the array
        bR = (R // SUBLANES) * SUBLANES
    inner = -(-per_core_rows // bR)
    needs_mask = (nsplit * inner * bR != R)

    kernel = _make_kernel(inner=inner, block_rows=bR, total_rows=R,
                          needs_mask=needs_mask,
                          binary_targets=assume_binary_targets)

    in_spec = pl.BlockSpec((bR, lanes), lambda c, i: (c * inner + i, 0))
    acc_spec = pl.BlockSpec((SUBLANES, lanes), lambda c, i: (c, 0))

    loss_acc, tgt_acc = pl.pallas_call(
        kernel,
        grid=(nsplit, inner),
        in_specs=[in_spec, in_spec],
        out_specs=(acc_spec, acc_spec),
        out_shape=(
            jax.ShapeDtypeStruct((nsplit * SUBLANES, lanes), jnp.float32),
            jax.ShapeDtypeStruct((nsplit * SUBLANES, lanes), jnp.float32),
        ),
        compiler_params=pltpu.CompilerParams(
            dimension_semantics=("parallel", "arbitrary"),
            vmem_limit_bytes=VMEM_LIMIT_BYTES,
        ),
    )(xv, tv)

    # ---- tiny epilogue on O(nsplit * 8 * lanes) floats ----------------------------------
    lane_loss = jnp.sum(loss_acc, axis=0)              # (lanes,)
    lane_tgt = jnp.sum(tgt_acc, axis=0)
    # task = lane % T for both views (flat: T | 128; generic: lanes == T).
    per_task_nll = lane_loss.reshape(-1, T).sum(axis=0)
    per_task_tgt = lane_tgt.reshape(-1, T).sum(axis=0)

    a = (-per_task_nll) / jnp.float32(B)                # mean BCE per task
    b = jnp.where(per_task_tgt == 0.0, 1.0, per_task_tgt)   # b[b == 0] = 1
    return jnp.sum(a / b)


if __name__ == "__main__":
    NB_TASKS = 32
    # ULoss.__init__: weights = ones(nb_tasks); unused in forward, kept for fidelity.
    weights = jnp.ones((NB_TASKS,), jnp.float32)

    def make_inputs(key, b, t_dim, dtype=jnp.float32):
        k1, k2 = jax.random.split(key)
        x = jax.nn.sigmoid(jax.random.normal(k1, (b, t_dim), jnp.float32)).astype(dtype)
        tg = (jax.random.uniform(k2, (b, t_dim)) > 0.5).astype(dtype)
        tg = tg.at[:, 0].set(0)          # exercise the b == 0 -> 1 branch
        return x, tg

    key = jax.random.PRNGKey(0)
    checks = []

    # 1) lane-dense flat path (T | 128, B*T % 128 == 0), f32
    key, k = jax.random.split(key)
    x1, t1 = make_inputs(k, 1024, NB_TASKS)
    out1 = jax.jit(uloss_forward)(x1, t1, weights)
    checks.append(("flat_f32", out1, uloss_reference(x1, t1), 1e-5))

    # 2) generic path: non-power-of-2 T, ragged batch -> in-kernel row masking
    key, k = jax.random.split(key)
    x2, t2 = make_inputs(k, 1003, 24)
    out2 = jax.jit(uloss_forward)(x2, t2, weights)
    checks.append(("generic_masked", out2, uloss_reference(x2, t2), 1e-5))

    # 3) tiny problem -> pure-JAX fallback path
    key, k = jax.random.split(key)
    x3, t3 = make_inputs(k, 8, NB_TASKS)
    out3 = jax.jit(uloss_forward)(x3, t3, weights)
    checks.append(("tiny_fallback", out3, uloss_reference(x3, t3), 1e-6))

    # 4) bf16 inputs + single-log binary-target fast path
    xb, tb = x1.astype(jnp.bfloat16), t1.astype(jnp.bfloat16)
    out4 = jax.jit(functools.partial(uloss_forward, assume_binary_targets=True))(xb, tb, weights)
    checks.append(("bf16_binary", out4,
                   uloss_reference(xb.astype(jnp.float32), tb.astype(jnp.float32)), 1e-3))

    for name, out, ref, tol in checks:
        out = jax.block_until_ready(out)
        ref = jax.block_until_ready(ref)
        assert jnp.allclose(out, ref, rtol=tol, atol=tol), (name, out, ref)

    print("KERNEL_OK")
</pallas_src>

<mosaic_0001>
module attributes {stable_mosaic.version = 11 : i64} {
  func.func @kernel(%arg0: i32, %arg1: i32, %arg2: memref<256x128xf32, #tpu.memory_space<vmem>>, %arg3: memref<256x128xf32, #tpu.memory_space<vmem>>, %arg4: memref<8x128xf32, #tpu.memory_space<vmem>>, %arg5: memref<8x128xf32, #tpu.memory_space<vmem>>) attributes {dimension_semantics = [#tpu.dimension_semantics<parallel>, #tpu.dimension_semantics<arbitrary>], iteration_bounds = array<i64: 1, 1>, scalar_prefetch = 0 : i64, scratch_operands = 0 : i64, tpu.core_type = #tpu.core_type<tc>, window_params = [{transform_indices = @transform_0, window_bounds = array<i64: 256, 128>}, {transform_indices = @transform_1, window_bounds = array<i64: 256, 128>}, {transform_indices = @transform_2, window_bounds = array<i64: 8, 128>}, {transform_indices = @transform_3, window_bounds = array<i64: 8, 128>}]} {
    %c0_i32 = arith.constant 0 : i32
    %0 = arith.cmpi eq, %arg1, %c0_i32 : i32
    %1 = arith.extui %0 : i1 to i32
    %c0_i32_0 = arith.constant 0 : i32
    %2 = arith.cmpi ne, %1, %c0_i32_0 : i32
    scf.if %2 {
      %cst_16 = arith.constant 0.000000e+00 : f32
      %26 = vector.broadcast %cst_16 : f32 to vector<8x128xf32>
      %c0_17 = arith.constant 0 : index
      %c0_18 = arith.constant 0 : index
      %27 = vector.load %arg4[%c0_17, %c0_18] : memref<8x128xf32, #tpu.memory_space<vmem>>, vector<8x128xf32>
      tpu.vector_store %arg4[%c0_17, %c0_18], %26 {strides = array<i32>} : memref<8x128xf32, #tpu.memory_space<vmem>>, vector<8x128xf32>,
      %cst_19 = arith.constant 0.000000e+00 : f32
      %28 = vector.broadcast %cst_19 : f32 to vector<8x128xf32>
      %c0_20 = arith.constant 0 : index
      %c0_21 = arith.constant 0 : index
      %29 = vector.load %arg5[%c0_20, %c0_21] : memref<8x128xf32, #tpu.memory_space<vmem>>, vector<8x128xf32>
      tpu.vector_store %arg5[%c0_20, %c0_21], %28 {strides = array<i32>} : memref<8x128xf32, #tpu.memory_space<vmem>>, vector<8x128xf32>,
    } else {
    }
    %c0 = arith.constant 0 : index
    %c0_1 = arith.constant 0 : index
    %3 = vector.load %arg2[%c0, %c0_1] : memref<256x128xf32, #tpu.memory_space<vmem>>, vector<256x128xf32>
    %c0_2 = arith.constant 0 : index
    %c0_3 = arith.constant 0 : index
    %4 = vector.load %arg3[%c0_2, %c0_3] : memref<256x128xf32, #tpu.memory_space<vmem>>, vector<256x128xf32>
    %5 = math.log %3 : vector<256x128xf32>
    %cst = arith.constant -1.000000e+02 : f32
    %6 = vector.broadcast %cst : f32 to vector<256x128xf32>
    %7 = arith.maximumf %5, %6 : vector<256x128xf32>
    %cst_4 = arith.constant 1.000000e+00 : f32
    %8 = vector.broadcast %cst_4 : f32 to vector<256x128xf32>
    %9 = arith.subf %8, %3 : vector<256x128xf32>
    %10 = math.log %9 : vector<256x128xf32>
    %cst_5 = arith.constant -1.000000e+02 : f32
    %11 = vector.broadcast %cst_5 : f32 to vector<256x128xf32>
    %12 = arith.maximumf %10, %11 : vector<256x128xf32>
    %13 = arith.subf %7, %12 : vector<256x128xf32>
    %14 = arith.mulf %4, %13 : vector<256x128xf32>
    %15 = arith.addf %12, %14 : vector<256x128xf32>
    %c0_6 = arith.constant 0 : index
    %c0_7 = arith.constant 0 : index
    %16 = vector.load %arg4[%c0_6, %c0_7] : memref<8x128xf32, #tpu.memory_space<vmem>>, vector<1x128xf32>
    %cst_8 = arith.constant dense<0.000000e+00> : vector<128xf32>
    %17 = vector.multi_reduction <add>, %15, %cst_8 [0] : vector<256x128xf32> to vector<128xf32>
    %18 = vector.shape_cast %17 : vector<128xf32> to vector<1x128xf32>
    %19 = arith.addf %16, %18 : vector<1x128xf32>
    %c0_9 = arith.constant 0 : index
    %c0_10 = arith.constant 0 : index
    %20 = vector.load %arg4[%c0_9, %c0_10] : memref<8x128xf32, #tpu.memory_space<vmem>>, vector<1x128xf32>
    tpu.vector_store %arg4[%c0_9, %c0_10], %19 {strides = array<i32>} : memref<8x128xf32, #tpu.memory_space<vmem>>, vector<1x128xf32>,
    %c0_11 = arith.constant 0 : index
    %c0_12 = arith.constant 0 : index
    %21 = vector.load %arg5[%c0_11, %c0_12] : memref<8x128xf32, #tpu.memory_space<vmem>>, vector<1x128xf32>
    %cst_13 = arith.constant dense<0.000000e+00> : vector<128xf32>
    %22 = vector.multi_reduction <add>, %4, %cst_13 [0] : vector<256x128xf32> to vector<128xf32>
    %23 = vector.shape_cast %22 : vector<128xf32> to vector<1x128xf32>
    %24 = arith.addf %21, %23 : vector<1x128xf32>
    %c0_14 = arith.constant 0 : index
    %c0_15 = arith.constant 0 : index
    %25 = vector.load %arg5[%c0_14, %c0_15] : memref<8x128xf32, #tpu.memory_space<vmem>>, vector<1x128xf32>
    tpu.vector_store %arg5[%c0_14, %c0_15], %24 {strides = array<i32>} : memref<8x128xf32, #tpu.memory_space<vmem>>, vector<1x128xf32>,
    return
  }
  func.func @transform_0(%arg0: i32, %arg1: i32) -> (i32, i32) {
    %c1_i32 = arith.constant 1 : i32
    %0 = arith.muli %arg0, %c1_i32 : i32
    %1 = arith.addi %0, %arg1 : i32
    %c0_i32 = arith.constant 0 : i32
    %c0_i32_0 = arith.constant 0 : i32
    return %1, %c0_i32 : i32, i32
  }
  func.func @transform_1(%arg0: i32, %arg1: i32) -> (i32, i32) {
    %c1_i32 = arith.constant 1 : i32
    %0 = arith.muli %arg0, %c1_i32 : i32
    %1 = arith.addi %0, %arg1 : i32
    %c0_i32 = arith.constant 0 : i32
    %c0_i32_0 = arith.constant 0 : i32
    return %1, %c0_i32 : i32, i32
  }
  func.func @transform_2(%arg0: i32, %arg1: i32) -> (i32, i32) {
    %c0_i32 = arith.constant 0 : i32
    %c0_i32_0 = arith.constant 0 : i32
    return %arg0, %c0_i32 : i32, i32
  }
  func.func @transform_3(%arg0: i32, %arg1: i32) -> (i32, i32) {
    %c0_i32 = arith.constant 0 : i32
    %c0_i32_0 = arith.constant 0 : i32
    return %arg0, %c0_i32 : i32, i32
  }
}

</mosaic_0001>

<llo_original>
// kernel: uloss_forward.1
$region0: #{uloss_forward.1}
  #allocation0 [shape = 'u32[]', space=smem, size = 0x4, offset = 0x4, fixed_abs, tag = 'smem constant byte address 0x4 - core index']
  #allocation1 [shape = 'u32[144,128]{1,0:T(1,128)}', space=vmem, size = 0x12000, scoped, tag = 'internal scratch']
  %s0 = inlined_call_operand.vmem [shape: f32[256,128], index: 0, kind: input, shape index: {}]
  %s1 = inlined_call_operand.vmem [shape: f32[256,128], index: 1, kind: input, shape index: {}]
  %s2 = inlined_call_operand.vmem [shape: f32[8,128], index: 2, kind: output, shape index: {0}]
  %s3 = inlined_call_operand.vmem [shape: f32[8,128], index: 3, kind: output, shape index: {1}]
  %4 = xla_tuple %s2, %s3
  %s5 = sld [smem:[#allocation0]]
  $region30: #{uloss_forward.1} parent=0
    _
  %s7 = ssub.s32 1, %s5
  %s8 = scalar_select 0, %s7, %s5
  // Predicated region
  $region2: #{uloss_forward.1} parent=0 // pred_check
    _
  $region3: #{uloss_forward.1} parent=0 // pred_check_branch
    %10 = sbr.rel (0) target = $region5
  $region4: #{uloss_forward.1} parent=0 // pred_region
    %s11 = sadd.s32 0, 0
    %s12 = smul.u32 32, %s11
    %p13 = scmp.lt.s32.totalorder %s12, 31
    %s14 = scalar_select %p13, %s12, 31
    %s15 = smul.addr %s14, 8
    %s16 = scalar_lea.vmem %s0, %s15
    %s17 = sadd.s32 0, 0
    %s18 = smul.u32 32, %s17
  $region5: #{uloss_forward.1} parent=0 // pred_fallthru
    _
  // Predicated region
  $region6: #{uloss_forward.1} parent=0 // pred_check
    _
  $region7: #{uloss_forward.1} parent=0 // pred_check_branch
    %20 = sbr.rel (0) target = $region9
  $region8: #{uloss_forward.1} parent=0 // pred_region
    %s21 = sadd.s32 0, 0
    %s22 = smul.u32 32, %s21
    %p23 = scmp.lt.s32.totalorder %s22, 31
    %s24 = scalar_select %p23, %s22, 31
    %s25 = smul.addr %s24, 8
    %s26 = scalar_lea.vmem %s1, %s25
    %s27 = sadd.s32 0, 0
    %s28 = smul.u32 32, %s27
  $region9: #{uloss_forward.1} parent=0 // pred_fallthru
    _
  %s29 = sadd.s32 0, 0
  %s30 = smul.u32 32, %s29
  %p31 = scmp.lt.s32.totalorder %s30, 31
  %s32 = scalar_select %p31, %s30, 31
  %s33 = smul.addr %s32, 8
  %s34 = scalar_lea.vmem %s0, %s33
  %s35 = sadd.s32 0, 0
  %s36 = smul.u32 32, %s35
  %p37 = scmp.lt.s32.totalorder %s36, 31
  %s38 = scalar_select %p37, %s36, 31
  %s39 = smul.addr %s38, 8
  %s40 = scalar_lea.vmem %s1, %s39
  %s41 = sadd.s32 0, 0
  %s42 = smul.u32 32, %s41
  %p43 = scmp.lt.s32.totalorder %s42, 31
  %s44 = scalar_select %p43, %s42, 31
  %s45 = smul.addr %s44, 8
  %s46 = scalar_lea.vmem %s0, %s45
  %s47 = sadd.s32 0, 0
  %s48 = smul.u32 32, %s47
  %s49 = sadd.s32 0, 0
  %s50 = smul.u32 32, %s49
  %p51 = scmp.lt.s32.totalorder %s50, 31
  %s52 = scalar_select %p51, %s50, 31
  %s53 = smul.addr %s52, 8
  %s54 = scalar_lea.vmem %s1, %s53
  %s55 = sadd.s32 0, 0
  %s56 = smul.u32 32, %s55
  %p57 = scmp.eq.s32.totalorder 0, 0
  // Predicated region
  $region10: #{uloss_forward.1} parent=0 // pred_check
    %p58 = pneg %p57
  $region11: #{uloss_forward.1} parent=0 // pred_check_branch
    %60 = sbr.rel (%p58) target = $region13
  $region12: #{uloss_forward.1} parent=0 // pred_region
    %61 = vst [vmem:[%s2] sm:$0xff] 0.0
    %62 = vst [vmem:[%s3] sm:$0xff] 0.0
  $region13: #{uloss_forward.1} parent=0 // pred_fallthru
    _
  %v63 = vld [vmem:[%s46] sm:$0xff]
  %v64 = vld [vmem:[%s46 + $0x8] sm:$0xff]
  %v65 = vld [vmem:[%s46 + $0x10] sm:$0xff]
  %v66 = vld [vmem:[%s46 + $0x18] sm:$0xff]
  %v67 = vld [vmem:[%s46 + $0x20] sm:$0xff]
  %v68 = vld [vmem:[%s46 + $0x28] sm:$0xff]
  %v69 = vld [vmem:[%s46 + $0x30] sm:$0xff]
  %v70 = vld [vmem:[%s46 + $0x38] sm:$0xff]
  %v71 = vld [vmem:[%s46 + $0x40] sm:$0xff]
  %v72 = vld [vmem:[%s46 + $0x48] sm:$0xff]
  %v73 = vld [vmem:[%s46 + $0x50] sm:$0xff]
  %v74 = vld [vmem:[%s46 + $0x58] sm:$0xff]
  %v75 = vld [vmem:[%s46 + $0x60] sm:$0xff]
  %v76 = vld [vmem:[%s46 + $0x68] sm:$0xff]
  %v77 = vld [vmem:[%s46 + $0x70] sm:$0xff]
  %v78 = vld [vmem:[%s46 + $0x78] sm:$0xff]
  %v79 = vld [vmem:[%s46 + $0x80] sm:$0xff]
  %v80 = vld [vmem:[%s46 + $0x88] sm:$0xff]
  %v81 = vld [vmem:[%s46 + $0x90] sm:$0xff]
  %v82 = vld [vmem:[%s46 + $0x98] sm:$0xff]
  %v83 = vld [vmem:[%s46 + $0xa0] sm:$0xff]
  %v84 = vld [vmem:[%s46 + $0xa8] sm:$0xff]
  %v85 = vld [vmem:[%s46 + $0xb0] sm:$0xff]
  %v86 = vld [vmem:[%s46 + $0xb8] sm:$0xff]
  %v87 = vld [vmem:[%s46 + $0xc0] sm:$0xff]
  %v88 = vld [vmem:[%s46 + $0xc8] sm:$0xff]
  %v89 = vld [vmem:[%s46 + $0xd0] sm:$0xff]
  %v90 = vld [vmem:[%s46 + $0xd8] sm:$0xff]
  %v91 = vld [vmem:[%s46 + $0xe0] sm:$0xff]
  %v92 = vld [vmem:[%s46 + $0xe8] sm:$0xff]
  %v93 = vld [vmem:[%s46 + $0xf0] sm:$0xff]
  %v94 = vld [vmem:[%s46 + $0xf8] sm:$0xff]
  %v95 = vld [vmem:[%s54] sm:$0xff]
  %v96 = vld [vmem:[%s54 + $0x8] sm:$0xff]
  %v97 = vld [vmem:[%s54 + $0x10] sm:$0xff]
  %v98 = vld [vmem:[%s54 + $0x18] sm:$0xff]
  %v99 = vld [vmem:[%s54 + $0x20] sm:$0xff]
  %v100 = vld [vmem:[%s54 + $0x28] sm:$0xff]
  %v101 = vld [vmem:[%s54 + $0x30] sm:$0xff]
  %v102 = vld [vmem:[%s54 + $0x38] sm:$0xff]
  %v103 = vld [vmem:[%s54 + $0x40] sm:$0xff]
  %v104 = vld [vmem:[%s54 + $0x48] sm:$0xff]
  %v105 = vld [vmem:[%s54 + $0x50] sm:$0xff]
  %v106 = vld [vmem:[%s54 + $0x58] sm:$0xff]
  %v107 = vld [vmem:[%s54 + $0x60] sm:$0xff]
  %v108 = vld [vmem:[%s54 + $0x68] sm:$0xff]
  %v109 = vld [vmem:[%s54 + $0x70] sm:$0xff]
  %v110 = vld [vmem:[%s54 + $0x78] sm:$0xff]
  %v111 = vld [vmem:[%s54 + $0x80] sm:$0xff]
  %v112 = vld [vmem:[%s54 + $0x88] sm:$0xff]
  %v113 = vld [vmem:[%s54 + $0x90] sm:$0xff]
  %v114 = vld [vmem:[%s54 + $0x98] sm:$0xff]
  %v115 = vld [vmem:[%s54 + $0xa0] sm:$0xff]
  %v116 = vld [vmem:[%s54 + $0xa8] sm:$0xff]
  %v117 = vld [vmem:[%s54 + $0xb0] sm:$0xff]
  %v118 = vld [vmem:[%s54 + $0xb8] sm:$0xff]
  %v119 = vld [vmem:[%s54 + $0xc0] sm:$0xff]
  %v120 = vld [vmem:[%s54 + $0xc8] sm:$0xff]
  %v121 = vld [vmem:[%s54 + $0xd0] sm:$0xff]
  %v122 = vld [vmem:[%s54 + $0xd8] sm:$0xff]
  %v123 = vld [vmem:[%s54 + $0xe0] sm:$0xff]
  %v124 = vld [vmem:[%s54 + $0xe8] sm:$0xff]
  %v125 = vld [vmem:[%s54 + $0xf0] sm:$0xff]
  %v126 = vld [vmem:[%s54 + $0xf8] sm:$0xff]
  %v127 = vlog2.pop %v63
  %v128 = vmul.f32 %v127, 0.6931472
  %v129 = vlog2.pop %v64
  %v130 = vmul.f32 %v129, 0.6931472
  %v131 = vlog2.pop %v65
  %v132 = vmul.f32 %v131, 0.6931472
  %v133 = vlog2.pop %v66
  %v134 = vmul.f32 %v133, 0.6931472
  %v135 = vlog2.pop %v67
  %v136 = vmul.f32 %v135, 0.6931472
  %v137 = vlog2.pop %v68
  %v138 = vmul.f32 %v137, 0.6931472
  %v139 = vlog2.pop %v69
  %v140 = vmul.f32 %v139, 0.6931472
  %v141 = vlog2.pop %v70
  %v142 = vmul.f32 %v141, 0.6931472
  %v143 = vlog2.pop %v71
  %v144 = vmul.f32 %v143, 0.6931472
  %v145 = vlog2.pop %v72
  %v146 = vmul.f32 %v145, 0.6931472
  %v147 = vlog2.pop %v73
  %v148 = vmul.f32 %v147, 0.6931472
  %v149 = vlog2.pop %v74
  %v150 = vmul.f32 %v149, 0.6931472
  %v151 = vlog2.pop %v75
  %v152 = vmul.f32 %v151, 0.6931472
  %v153 = vlog2.pop %v76
  %v154 = vmul.f32 %v153, 0.6931472
  %v155 = vlog2.pop %v77
  %v156 = vmul.f32 %v155, 0.6931472
  %v157 = vlog2.pop %v78
  %v158 = vmul.f32 %v157, 0.6931472
  %v159 = vlog2.pop %v79
  %v160 = vmul.f32 %v159, 0.6931472
  %v161 = vlog2.pop %v80
  %v162 = vmul.f32 %v161, 0.6931472
  %v163 = vlog2.pop %v81
  %v164 = vmul.f32 %v163, 0.6931472
  %v165 = vlog2.pop %v82
  %v166 = vmul.f32 %v165, 0.6931472
  %v167 = vlog2.pop %v83
  %v168 = vmul.f32 %v167, 0.6931472
  %v169 = vlog2.pop %v84
  %v170 = vmul.f32 %v169, 0.6931472
  %v171 = vlog2.pop %v85
  %v172 = vmul.f32 %v171, 0.6931472
  %v173 = vlog2.pop %v86
  %v174 = vmul.f32 %v173, 0.6931472
  %v175 = vlog2.pop %v87
  %v176 = vmul.f32 %v175, 0.6931472
  %v177 = vlog2.pop %v88
  %v178 = vmul.f32 %v177, 0.6931472
  %v179 = vlog2.pop %v89
  %v180 = vmul.f32 %v179, 0.6931472
  %v181 = vlog2.pop %v90
  %v182 = vmul.f32 %v181, 0.6931472
  %v183 = vlog2.pop %v91
  %v184 = vmul.f32 %v183, 0.6931472
  %v185 = vlog2.pop %v92
  %v186 = vmul.f32 %v185, 0.6931472
  %v187 = vlog2.pop %v93
  %v188 = vmul.f32 %v187, 0.6931472
  %v189 = vlog2.pop %v94
  %v190 = vmul.f32 %v189, 0.6931472
  %v191 = vmax.f32 %v128, -100.0
  %v192 = vmax.f32 %v130, -100.0
  %v193 = vmax.f32 %v132, -100.0
  %v194 = vmax.f32 %v134, -100.0
  %v195 = vmax.f32 %v136, -100.0
  %v196 = vmax.f32 %v138, -100.0
  %v197 = vmax.f32 %v140, -100.0
  %v198 = vmax.f32 %v142, -100.0
  %v199 = vmax.f32 %v144, -100.0
  %v200 = vmax.f32 %v146, -100.0
  %v201 = vmax.f32 %v148, -100.0
  %v202 = vmax.f32 %v150, -100.0
  %v203 = vmax.f32 %v152, -100.0
  %v204 = vmax.f32 %v154, -100.0
  %v205 = vmax.f32 %v156, -100.0
  %v206 = vmax.f32 %v158, -100.0
  %v207 = vmax.f32 %v160, -100.0
  %v208 = vmax.f32 %v162, -100.0
  %v209 = vmax.f32 %v164, -100.0
  %v210 = vmax.f32 %v166, -100.0
  %v211 = vmax.f32 %v168, -100.0
  %v212 = vmax.f32 %v170, -100.0
  %v213 = vmax.f32 %v172, -100.0
  %v214 = vmax.f32 %v174, -100.0
  %v215 = vmax.f32 %v176, -100.0
  %v216 = vmax.f32 %v178, -100.0
  %v217 = vmax.f32 %v180, -100.0
  %v218 = vmax.f32 %v182, -100.0
  %v219 = vmax.f32 %v184, -100.0
  %v220 = vmax.f32 %v186, -100.0
  %v221 = vmax.f32 %v188, -100.0
  %v222 = vmax.f32 %v190, -100.0
  %v223 = vsub.f32 1.0, %v63
  %v224 = vsub.f32 1.0, %v64
  %v225 = vsub.f32 1.0, %v65
  %v226 = vsub.f32 1.0, %v66
  %v227 = vsub.f32 1.0, %v67
  %v228 = vsub.f32 1.0, %v68
  %v229 = vsub.f32 1.0, %v69
  %v230 = vsub.f32 1.0, %v70
  %v231 = vsub.f32 1.0, %v71
  %v232 = vsub.f32 1.0, %v72
  %v233 = vsub.f32 1.0, %v73
  %v234 = vsub.f32 1.0, %v74
  %v235 = vsub.f32 1.0, %v75
  %v236 = vsub.f32 1.0, %v76
  %v237 = vsub.f32 1.0, %v77
  %v238 = vsub.f32 1.0, %v78
  %v239 = vsub.f32 1.0, %v79
  %v240 = vsub.f32 1.0, %v80
  %v241 = vsub.f32 1.0, %v81
  %v242 = vsub.f32 1.0, %v82
  %v243 = vsub.f32 1.0, %v83
  %v244 = vsub.f32 1.0, %v84
  %v245 = vsub.f32 1.0, %v85
  %v246 = vsub.f32 1.0, %v86
  %v247 = vsub.f32 1.0, %v87
  %v248 = vsub.f32 1.0, %v88
  %v249 = vsub.f32 1.0, %v89
  %v250 = vsub.f32 1.0, %v90
  %v251 = vsub.f32 1.0, %v91
  %v252 = vsub.f32 1.0, %v92
  %v253 = vsub.f32 1.0, %v93
  %v254 = vsub.f32 1.0, %v94
  %v255 = vlog2.pop %v223
  %v256 = vmul.f32 %v255, 0.6931472
  %v257 = vlog2.pop %v224
  %v258 = vmul.f32 %v257, 0.6931472
  %v259 = vlog2.pop %v225
  %v260 = vmul.f32 %v259, 0.6931472
  %v261 = vlog2.pop %v226
  %v262 = vmul.f32 %v261, 0.6931472
  %v263 = vlog2.pop %v227
  %v264 = vmul.f32 %v263, 0.6931472
  %v265 = vlog2.pop %v228
  %v266 = vmul.f32 %v265, 0.6931472
  %v267 = vlog2.pop %v229
  %v268 = vmul.f32 %v267, 0.6931472
  %v269 = vlog2.pop %v230
  %v270 = vmul.f32 %v269, 0.6931472
  %v271 = vlog2.pop %v231
  %v272 = vmul.f32 %v271, 0.6931472
  %v273 = vlog2.pop %v232
  %v274 = vmul.f32 %v273, 0.6931472
  %v275 = vlog2.pop %v233
  %v276 = vmul.f32 %v275, 0.6931472
  %v277 = vlog2.pop %v234
  %v278 = vmul.f32 %v277, 0.6931472
  %v279 = vlog2.pop %v235
  %v280 = vmul.f32 %v279, 0.6931472
  %v281 = vlog2.pop %v236
  %v282 = vmul.f32 %v281, 0.6931472
  %v283 = vlog2.pop %v237
  %v284 = vmul.f32 %v283, 0.6931472
  %v285 = vlog2.pop %v238
  %v286 = vmul.f32 %v285, 0.6931472
  %v287 = vlog2.pop %v239
  %v288 = vmul.f32 %v287, 0.6931472
  %v289 = vlog2.pop %v240
  %v290 = vmul.f32 %v289, 0.6931472
  %v291 = vlog2.pop %v241
  %v292 = vmul.f32 %v291, 0.6931472
  %v293 = vlog2.pop %v242
  %v294 = vmul.f32 %v293, 0.6931472
  %v295 = vlog2.pop %v243
  %v296 = vmul.f32 %v295, 0.6931472
  %v297 = vlog2.pop %v244
  %v298 = vmul.f32 %v297, 0.6931472
  %v299 = vlog2.pop %v245
  %v300 = vmul.f32 %v299, 0.6931472
  %v301 = vlog2.pop %v246
  %v302 = vmul.f32 %v301, 0.6931472
  %v303 = vlog2.pop %v247
  %v304 = vmul.f32 %v303, 0.6931472
  %v305 = vlog2.pop %v248
  %v306 = vmul.f32 %v305, 0.6931472
  %v307 = vlog2.pop %v249
  %v308 = vmul.f32 %v307, 0.6931472
  %v309 = vlog2.pop %v250
  %v310 = vmul.f32 %v309, 0.6931472
  %v311 = vlog2.pop %v251
  %v312 = vmul.f32 %v311, 0.6931472
  %v313 = vlog2.pop %v252
  %v314 = vmul.f32 %v313, 0.6931472
  %v315 = vlog2.pop %v253
  %v316 = vmul.f32 %v315, 0.6931472
  %v317 = vlog2.pop %v254
  %v318 = vmul.f32 %v317, 0.6931472
  %v319 = vmax.f32 %v256, -100.0
  %v320 = vmax.f32 %v258, -100.0
  %v321 = vmax.f32 %v260, -100.0
  %v322 = vmax.f32 %v262, -100.0
  %v323 = vmax.f32 %v264, -100.0
  %v324 = vmax.f32 %v266, -100.0
  %v325 = vmax.f32 %v268, -100.0
  %v326 = vmax.f32 %v270, -100.0
  %v327 = vmax.f32 %v272, -100.0
  %v328 = vmax.f32 %v274, -100.0
  %v329 = vmax.f32 %v276, -100.0
  %v330 = vmax.f32 %v278, -100.0
  %v331 = vmax.f32 %v280, -100.0
  %v332 = vmax.f32 %v282, -100.0
  %v333 = vmax.f32 %v284, -100.0
  %v334 = vmax.f32 %v286, -100.0
  %v335 = vmax.f32 %v288, -100.0
  %v336 = vmax.f32 %v290, -100.0
  %v337 = vmax.f32 %v292, -100.0
  %v338 = vmax.f32 %v294, -100.0
  %v339 = vmax.f32 %v296, -100.0
  %v340 = vmax.f32 %v298, -100.0
  %v341 = vmax.f32 %v300, -100.0
  %v342 = vmax.f32 %v302, -100.0
  %v343 = vmax.f32 %v304, -100.0
  %v344 = vmax.f32 %v306, -100.0
  %v345 = vmax.f32 %v308, -100.0
  %v346 = vmax.f32 %v310, -100.0
  %v347 = vmax.f32 %v312, -100.0
  %v348 = vmax.f32 %v314, -100.0
  %v349 = vmax.f32 %v316, -100.0
  %v350 = vmax.f32 %v318, -100.0
  %v351 = vsub.f32 %v191, %v319
  %v352 = vsub.f32 %v192, %v320
  %v353 = vsub.f32 %v193, %v321
  %v354 = vsub.f32 %v194, %v322
  %v355 = vsub.f32 %v195, %v323
  %v356 = vsub.f32 %v196, %v324
  %v357 = vsub.f32 %v197, %v325
  %v358 = vsub.f32 %v198, %v326
  %v359 = vsub.f32 %v199, %v327
  %v360 = vsub.f32 %v200, %v328
  %v361 = vsub.f32 %v201, %v329
  %v362 = vsub.f32 %v202, %v330
  %v363 = vsub.f32 %v203, %v331
  %v364 = vsub.f32 %v204, %v332
  %v365 = vsub.f32 %v205, %v333
  %v366 = vsub.f32 %v206, %v334
  %v367 = vsub.f32 %v207, %v335
  %v368 = vsub.f32 %v208, %v336
  %v369 = vsub.f32 %v209, %v337
  %v370 = vsub.f32 %v210, %v338
  %v371 = vsub.f32 %v211, %v339
  %v372 = vsub.f32 %v212, %v340
  %v373 = vsub.f32 %v213, %v341
  %v374 = vsub.f32 %v214, %v342
  %v375 = vsub.f32 %v215, %v343
  %v376 = vsub.f32 %v216, %v344
  %v377 = vsub.f32 %v217, %v345
  %v378 = vsub.f32 %v218, %v346
  %v379 = vsub.f32 %v219, %v347
  %v380 = vsub.f32 %v220, %v348
  %v381 = vsub.f32 %v221, %v349
  %v382 = vsub.f32 %v222, %v350
  %v383 = vmul.f32 %v95, %v351
  %v384 = vmul.f32 %v96, %v352
  %v385 = vmul.f32 %v97, %v353
  %v386 = vmul.f32 %v98, %v354
  %v387 = vmul.f32 %v99, %v355
  %v388 = vmul.f32 %v100, %v356
  %v389 = vmul.f32 %v101, %v357
  %v390 = vmul.f32 %v102, %v358
  %v391 = vmul.f32 %v103, %v359
  %v392 = vmul.f32 %v104, %v360
  %v393 = vmul.f32 %v105, %v361
  %v394 = vmul.f32 %v106, %v362
  %v395 = vmul.f32 %v107, %v363
  %v396 = vmul.f32 %v108, %v364
  %v397 = vmul.f32 %v109, %v365
  %v398 = vmul.f32 %v110, %v366
  %v399 = vmul.f32 %v111, %v367
  %v400 = vmul.f32 %v112, %v368
  %v401 = vmul.f32 %v113, %v369
  %v402 = vmul.f32 %v114, %v370
  %v403 = vmul.f32 %v115, %v371
  %v404 = vmul.f32 %v116, %v372
  %v405 = vmul.f32 %v117, %v373
  %v406 = vmul.f32 %v118, %v374
  %v407 = vmul.f32 %v119, %v375
  %v408 = vmul.f32 %v120, %v376
  %v409 = vmul.f32 %v121, %v377
  %v410 = vmul.f32 %v122, %v378
  %v411 = vmul.f32 %v123, %v379
  %v412 = vmul.f32 %v124, %v380
  %v413 = vmul.f32 %v125, %v381
  %v414 = vmul.f32 %v126, %v382
  %v415 = vadd.f32 %v319, %v383
  %v416 = vadd.f32 %v320, %v384
  %v417 = vadd.f32 %v321, %v385
  %v418 = vadd.f32 %v322, %v386
  %v419 = vadd.f32 %v323, %v387
  %v420 = vadd.f32 %v324, %v388
  %v421 = vadd.f32 %v325, %v389
  %v422 = vadd.f32 %v326, %v390
  %v423 = vadd.f32 %v327, %v391
  %v424 = vadd.f32 %v328, %v392
  %v425 = vadd.f32 %v329, %v393
  %v426 = vadd.f32 %v330, %v394
  %v427 = vadd.f32 %v331, %v395
  %v428 = vadd.f32 %v332, %v396
  %v429 = vadd.f32 %v333, %v397
  %v430 = vadd.f32 %v334, %v398
  %v431 = vadd.f32 %v335, %v399
  %v432 = vadd.f32 %v336, %v400
  %v433 = vadd.f32 %v337, %v401
  %v434 = vadd.f32 %v338, %v402
  %v435 = vadd.f32 %v339, %v403
  %v436 = vadd.f32 %v340, %v404
  %v437 = vadd.f32 %v341, %v405
  %v438 = vadd.f32 %v342, %v406
  %v439 = vadd.f32 %v343, %v407
  %v440 = vadd.f32 %v344, %v408
  %v441 = vadd.f32 %v345, %v409
  %v442 = vadd.f32 %v346, %v410
  %v443 = vadd.f32 %v347, %v411
  %v444 = vadd.f32 %v348, %v412
  %v445 = vadd.f32 %v349, %v413
  %v446 = vadd.f32 %v350, %v414
  %v447 = vld [vmem:[%s2] sm:$0x1]
  %v448 = vadd.f32 %v415, %v416
  %v449 = vadd.f32 %v448, %v417
  %v450 = vadd.f32 %v449, %v418
  %v451 = vadd.f32 %v450, %v419
  %v452 = vadd.f32 %v451, %v420
  %v453 = vadd.f32 %v452, %v421
  %v454 = vadd.f32 %v453, %v422
  %v455 = vadd.f32 %v454, %v423
  %v456 = vadd.f32 %v455, %v424
  %v457 = vadd.f32 %v456, %v425
  %v458 = vadd.f32 %v457, %v426
  %v459 = vadd.f32 %v458, %v427
  %v460 = vadd.f32 %v459, %v428
  %v461 = vadd.f32 %v460, %v429
  %v462 = vadd.f32 %v461, %v430
  %v463 = vadd.f32 %v462, %v431
  %v464 = vadd.f32 %v463, %v432
  %v465 = vadd.f32 %v464, %v433
  %v466 = vadd.f32 %v465, %v434
  %v467 = vadd.f32 %v466, %v435
  %v468 = vadd.f32 %v467, %v436
  %v469 = vadd.f32 %v468, %v437
  %v470 = vadd.f32 %v469, %v438
  %v471 = vadd.f32 %v470, %v439
  %v472 = vadd.f32 %v471, %v440
  %v473 = vadd.f32 %v472, %v441
  %v474 = vadd.f32 %v473, %v442
  %v475 = vadd.f32 %v474, %v443
  %v476 = vadd.f32 %v475, %v444
  %v477 = vadd.f32 %v476, %v445
  %v478 = vadd.f32 %v477, %v446
  %v479 = vrot.slane %v478, 4
  %v480 = vadd.f32 %v478, %v479
  %v481 = vrot.slane %v480, 2
  %v482 = vadd.f32 %v480, %v481
  %v483 = vrot.slane %v482, 1
  %v484 = vadd.f32 %v482, %v483
  %v485 = vadd.f32 %v447, %v484
  %486 = vst [vmem:[%s2] sm:$0x1] %v485
  %v487 = vld [vmem:[%s3] sm:$0x1]
  %v488 = vadd.f32 %v95, %v96
  %v489 = vadd.f32 %v488, %v97
  %v490 = vadd.f32 %v489, %v98
  %v491 = vadd.f32 %v490, %v99
  %v492 = vadd.f32 %v491, %v100
  %v493 = vadd.f32 %v492, %v101
  %v494 = vadd.f32 %v493, %v102
  %v495 = vadd.f32 %v494, %v103
  %v496 = vadd.f32 %v495, %v104
  %v497 = vadd.f32 %v496, %v105
  %v498 = vadd.f32 %v497, %v106
  %v499 = vadd.f32 %v498, %v107
  %v500 = vadd.f32 %v499, %v108
  %v501 = vadd.f32 %v500, %v109
  %v502 = vadd.f32 %v501, %v110
  %v503 = vadd.f32 %v502, %v111
  %v504 = vadd.f32 %v503, %v112
  %v505 = vadd.f32 %v504, %v113
  %v506 = vadd.f32 %v505, %v114
  %v507 = vadd.f32 %v506, %v115
  %v508 = vadd.f32 %v507, %v116
  %v509 = vadd.f32 %v508, %v117
  %v510 = vadd.f32 %v509, %v118
  %v511 = vadd.f32 %v510, %v119
  %v512 = vadd.f32 %v511, %v120
  %v513 = vadd.f32 %v512, %v121
  %v514 = vadd.f32 %v513, %v122
  %v515 = vadd.f32 %v514, %v123
  %v516 = vadd.f32 %v515, %v124
  %v517 = vadd.f32 %v516, %v125
  %v518 = vadd.f32 %v517, %v126
  %v519 = vrot.slane %v518, 4
  %v520 = vadd.f32 %v518, %v519
  %v521 = vrot.slane %v520, 2
  %v522 = vadd.f32 %v520, %v521
  %v523 = vrot.slane %v522, 1
  %v524 = vadd.f32 %v522, %v523
  %v525 = vadd.f32 %v487, %v524
  %526 = vst [vmem:[%s3] sm:$0x1] %v525
  // Predicated region
  $region14: #{uloss_forward.1} parent=0 // pred_check
    _
  $region15: #{uloss_forward.1} parent=0 // pred_check_branch
    %528 = sbr.rel (0) target = $region17
  $region16: #{uloss_forward.1} parent=0 // pred_region
    _
  $region17: #{uloss_forward.1} parent=0 // pred_fallthru
    _
  // Predicated region
  $region18: #{uloss_forward.1} parent=0 // pred_check
    _
  $region19: #{uloss_forward.1} parent=0 // pred_check_branch
    %530 = sbr.rel (0) target = $region21
  $region20: #{uloss_forward.1} parent=0 // pred_region
    _
  $region21: #{uloss_forward.1} parent=0 // pred_fallthru
    _
  // Predicated region
  $region22: #{uloss_forward.1} parent=0 // pred_check
    _
  $region23: #{uloss_forward.1} parent=0 // pred_check_branch
    %532 = sbr.rel (0) target = $region25
  $region24: #{uloss_forward.1} parent=0 // pred_region
    _
  $region25: #{uloss_forward.1} parent=0 // pred_fallthru
    _
  // Predicated region
  $region26: #{uloss_forward.1} parent=0 // pred_check
    _
  $region27: #{uloss_forward.1} parent=0 // pred_check_branch
    %534 = sbr.rel (0) target = $region29
  $region28: #{uloss_forward.1} parent=0 // pred_region
    _
  $region29: #{uloss_forward.1} parent=0 // pred_fallthru
    _

</llo_original>
